<compile_context>
chip_gen: v7x
topology: tpu7x:2x2x1
jax: 0.10.0
libtpu: 0.0.40
codegen_flags: <defaults>
</compile_context>

<pallas_src>
import functools

import jax
import jax.numpy as jnp
from jax.experimental import pallas as pl
from jax.experimental.pallas import tpu as pltpu


def _round_up(x, m):
    return ((x + m - 1) // m) * m


def _vmem_capacity_bytes():
    """Per-TensorCore VMEM capacity; conservative 64 MiB (v7x) fallback."""
    try:
        return int(pltpu.get_tpu_info().vmem_capacity_bytes)
    except Exception:  # query unavailable -> assume the tightest chip
        return 64 << 20


# ---------------------------------------------------------------------------
# Path A: W resident in VMEM, grid only over row tiles.
# ---------------------------------------------------------------------------
def _residual_linear_resident_kernel(x_ref, w_ref, b_ref, o_ref, *, mxu_bf16):
    x = x_ref[...]                                             # [tm, H_pad]
    if mxu_bf16:
        lhs = x.astype(jnp.bfloat16)
        rhs = w_ref[...].astype(jnp.bfloat16)
    else:
        lhs = x
        rhs = w_ref[...]
    y = jnp.dot(lhs, rhs, preferred_element_type=jnp.float32)  # MXU, f32 acc
    y = y + b_ref[...].astype(jnp.float32)                     # bias    (VPU)
    y = y + x.astype(jnp.float32)                              # residual(VPU)
    o_ref[...] = y.astype(o_ref.dtype)


# ---------------------------------------------------------------------------
# Path B: K-tiled fallback with f32 accumulator scratch (W too big for VMEM).
# Residual is fused from the matmul lhs tile at k == j (requires tn == tk);
# bias is applied exactly once at finalize.
# ---------------------------------------------------------------------------
def _residual_linear_ktiled_kernel(x_ref, w_ref, b_ref, o_ref, acc_ref, *,
                                   mxu_bf16):
    j = pl.program_id(1)
    k = pl.program_id(2)

    @pl.when(k == 0)
    def _():
        acc_ref[...] = jnp.zeros_like(acc_ref)

    x = x_ref[...]                                             # [tm, tk]
    if mxu_bf16:
        lhs = x.astype(jnp.bfloat16)
        rhs = w_ref[...].astype(jnp.bfloat16)
    else:
        lhs = x
        rhs = w_ref[...]
    acc_ref[...] += jnp.dot(lhs, rhs, preferred_element_type=jnp.float32)

    # Residual: the lhs tile at k == j is exactly the (i, j) output-aligned
    # x tile (tn == tk), so no separate residual input / HBM re-read of x.
    @pl.when(k == j)
    def _():
        acc_ref[...] += x.astype(jnp.float32)

    @pl.when(k == pl.num_programs(2) - 1)
    def _():
        y = acc_ref[...] + b_ref[...].astype(jnp.float32)
        o_ref[...] = y.astype(o_ref.dtype)


def residual_linear(x, w, b, *, mxu_bf16=False, force_ktiled=False):
    """Residual(Linear): (x @ w + b) + x, fused in a single Pallas TPU kernel.

    x: [N, H], w: [H, H], b: [H].
    mxu_bf16: run the MXU in bf16 (f32 accumulation; bias/residual in f32).
      ~3-8x MXU throughput for f32 inputs on v6e/v7x at ~1e-3 relative error.
    """
    N, H = x.shape
    assert w.shape == (H, H) and b.shape == (H,)
    isz = jnp.dtype(x.dtype).itemsize

    # ---- lane-dense hidden dim: pad ONLY H, and skip when already aligned.
    #      The row dim is never padded: ragged final row tiles are masked by
    #      Pallas on writeback (garbage rows never reach HBM).
    H_pad = _round_up(H, 128)
    pad_h = H_pad != H
    if pad_h:
        xp = jnp.pad(x, ((0, 0), (0, H_pad - H)))
        wp = jnp.pad(w, ((0, H_pad - H), (0, H_pad - H)))
        bp = jnp.pad(b, (0, H_pad - H)).reshape(1, H_pad)
    else:
        xp, wp, bp = x, w, b.reshape(1, H_pad)

    # ---- row tile: multiple of 8, capped at 512, and chosen so that there
    #      are >= 2 row tiles whenever N > 8 (v7x megacore gets both TCs).
    if N <= 8:
        tm = N                                   # single full-extent block
    else:
        tm = min(512, _round_up(-(-N // 2), 8))
    n_row_tiles = pl.cdiv(N, tm)

    flops = 2 * N * H_pad * H_pad
    io_bytes = isz * (2 * N * H_pad + H_pad * H_pad + H_pad)

    # ---- generation-aware VMEM budgets (v5e/v6e: 128 MiB, v7x: 64 MiB / TC).
    vmem_cap = _vmem_capacity_bytes()
    if vmem_cap >= (96 << 20):                   # v5e / v6e
        resident_gate = 96 << 20
        vmem_cap_limit = 100 << 20
    else:                                        # v7x (per-TC budget)
        resident_gate = 40 << 20
        vmem_cap_limit = 56 << 20

    # Resident-W footprint: x/out tiles double-buffered, W + bias single-
    # buffered (constant index_map, DMA'd once -> pl.Buffered(1)).
    resident_vmem = (2 * isz * tm * H_pad            # x tiles
                     + 2 * isz * tm * H_pad          # out tiles
                     + isz * (H_pad * H_pad + H_pad))
    use_resident = (not force_ktiled) and resident_vmem <= resident_gate

    if use_resident:
        # Defensive limit (allows a second W buffer too), capped per chip.
        limit_est = resident_vmem + isz * H_pad * H_pad + (4 << 20)
        vmem_limit = int(min(max(limit_est, 16 << 20), vmem_cap_limit))
        kern = functools.partial(_residual_linear_resident_kernel,
                                 mxu_bf16=mxu_bf16)
        out = pl.pallas_call(
            kern,
            out_shape=jax.ShapeDtypeStruct((N, H_pad), x.dtype),
            grid_spec=pltpu.PrefetchScalarGridSpec(
                num_scalar_prefetch=0,
                grid=(n_row_tiles,),
                in_specs=[
                    pl.BlockSpec((tm, H_pad), lambda i: (i, 0)),   # x tile
                    pl.BlockSpec((H_pad, H_pad), lambda i: (0, 0),
                                 pipeline_mode=pl.Buffered(1)),    # W resident
                    pl.BlockSpec((1, H_pad), lambda i: (0, 0),
                                 pipeline_mode=pl.Buffered(1)),    # bias
                ],
                out_specs=pl.BlockSpec((tm, H_pad), lambda i: (i, 0)),
            ),
            compiler_params=pltpu.CompilerParams(
                dimension_semantics=("parallel",),
                vmem_limit_bytes=vmem_limit,
            ),
            cost_estimate=pl.CostEstimate(
                flops=flops, transcendentals=0, bytes_accessed=io_bytes),
        )(xp, wp, bp)
        return out[:, :H] if pad_h else out

    # ----------------- K-tiled fallback (W too large to keep resident) ------
    def _pick_square_tile():
        budget = int(0.8 * vmem_cap_limit)
        est = 0
        for t in (1024, 512, 256, 128):
            if H_pad % t:
                continue
            est = (2 * isz * (tm * t + t * t)    # lhs + W tiles (double-buf)
                   + 2 * isz * tm * t            # out tiles
                   + 2 * isz * t                 # bias
                   + 4 * tm * t)                 # f32 accumulator scratch
            if est <= budget:
                return t, est
        return 128, est

    tn, ktiled_vmem = _pick_square_tile()
    tk = tn                                      # residual fusion needs tn==tk
    assert tn == tk
    grid = (n_row_tiles, H_pad // tn, H_pad // tk)
    vmem_limit = int(min(max(ktiled_vmem + (4 << 20), 16 << 20),
                         vmem_cap_limit))

    kern = functools.partial(_residual_linear_ktiled_kernel, mxu_bf16=mxu_bf16)
    out = pl.pallas_call(
        kern,
        out_shape=jax.ShapeDtypeStruct((N, H_pad), x.dtype),
        grid_spec=pltpu.PrefetchScalarGridSpec(
            num_scalar_prefetch=0,
            grid=grid,
            in_specs=[
                pl.BlockSpec((tm, tk), lambda i, j, k: (i, k)),  # x (lhs + res)
                pl.BlockSpec((tk, tn), lambda i, j, k: (k, j)),  # W
                pl.BlockSpec((1, tn), lambda i, j, k: (0, j)),   # bias
            ],
            out_specs=pl.BlockSpec((tm, tn), lambda i, j, k: (i, j)),
            scratch_shapes=[pltpu.VMEM((tm, tn), jnp.float32)],
        ),
        compiler_params=pltpu.CompilerParams(
            dimension_semantics=("parallel", "parallel", "arbitrary"),
            vmem_limit_bytes=vmem_limit,
        ),
        cost_estimate=pl.CostEstimate(
            flops=flops, transcendentals=0,
            bytes_accessed=(isz * (N * H_pad * (H_pad // tn)
                                   + H_pad * H_pad * int(n_row_tiles)
                                   + H_pad)
                            + isz * N * H_pad)),
    )(xp, wp, bp)
    return out[:, :H] if pad_h else out


if __name__ == "__main__":
    # Small shapes consistent with the module: batch=2, seq=8, hidden=32.
    # (hidden is padded to 128 for lane density; real wins appear for
    #  hidden >= 512, but correctness of every schedule is exercised here.)
    batch, seq, hidden = 2, 8, 32
    key = jax.random.PRNGKey(0)
    kx, kw, kb = jax.random.split(key, 3)

    x = jax.random.normal(kx, (batch, seq, hidden), dtype=jnp.float32)
    w = jax.random.normal(kw, (hidden, hidden), dtype=jnp.float32) * 0.02
    b = jax.random.normal(kb, (hidden,), dtype=jnp.float32) * 0.02

    x2d = x.reshape(batch * seq, hidden)          # glue reshape (plain JAX)

    # Pure-JAX reference of Residual(Linear).
    ref = x2d @ w + b + x2d

    # Path A: resident-W, exact f32 numerics (default).
    out_a = residual_linear(x2d, w, b)
    jax.block_until_ready(out_a)
    assert jnp.allclose(out_a, ref, atol=1e-5, rtol=1e-5), "resident mismatch"

    # Path A with bf16 MXU (f32 accumulation) - relaxed tolerance.
    out_a16 = residual_linear(x2d, w, b, mxu_bf16=True)
    jax.block_until_ready(out_a16)
    assert jnp.allclose(out_a16, ref, atol=2e-2, rtol=2e-2), "bf16 mismatch"

    # Path B: K-tiled fallback (forced) - validates the large-H schedule.
    out_b = residual_linear(x2d, w, b, force_ktiled=True)
    jax.block_until_ready(out_b)
    assert jnp.allclose(out_b, ref, atol=1e-5, rtol=1e-5), "k-tiled mismatch"

    print("KERNEL_OK")
</pallas_src>

<mosaic_0001>
module attributes {stable_mosaic.version = 11 : i64} {
  func.func @_residual_linear_resident_kernel(%arg0: i32, %arg1: memref<8x128xf32, #tpu.memory_space<vmem>>, %arg2: memref<128x128xf32, #tpu.memory_space<vmem>>, %arg3: memref<1x128xf32, #tpu.memory_space<vmem>>, %arg4: memref<8x128xf32, #tpu.memory_space<vmem>>) attributes {dimension_semantics = [#tpu.dimension_semantics<parallel>], iteration_bounds = array<i64: 2>, scalar_prefetch = 0 : i64, scratch_operands = 0 : i64, tpu.core_type = #tpu.core_type<tc>, window_params = [{transform_indices = @transform_0, window_bounds = array<i64: 8, 128>}, {pipeline_mode = #tpu.pipeline_mode<synchronous>, transform_indices = @transform_1, window_bounds = array<i64: 128, 128>}, {pipeline_mode = #tpu.pipeline_mode<synchronous>, transform_indices = @transform_2, window_bounds = array<i64: 1, 128>}, {transform_indices = @transform_3, window_bounds = array<i64: 8, 128>}]} {
    %c0 = arith.constant 0 : index
    %c0_0 = arith.constant 0 : index
    %0 = vector.load %arg1[%c0, %c0_0] : memref<8x128xf32, #tpu.memory_space<vmem>>, vector<8x128xf32>
    %c0_1 = arith.constant 0 : index
    %c0_2 = arith.constant 0 : index
    %1 = vector.load %arg2[%c0_1, %c0_2] : memref<128x128xf32, #tpu.memory_space<vmem>>, vector<128x128xf32>
    %cst = arith.constant dense<0.000000e+00> : vector<8x128xf32>
    %2 = tpu.matmul %0, %1, %cst {dimension_numbers = #tpu.dot_dimension_numbers<[1], [0], [0], [1], [0, 0, 1, 1], [], []>} : vector<8x128xf32>, vector<128x128xf32>, vector<8x128xf32> -> vector<8x128xf32>
    %c0_3 = arith.constant 0 : index
    %c0_4 = arith.constant 0 : index
    %3 = vector.load %arg3[%c0_3, %c0_4] : memref<1x128xf32, #tpu.memory_space<vmem>>, vector<1x128xf32>
    %4 = vector.broadcast %3 : vector<1x128xf32> to vector<8x128xf32>
    %5 = arith.addf %2, %4 : vector<8x128xf32>
    %6 = arith.addf %5, %0 : vector<8x128xf32>
    %c0_5 = arith.constant 0 : index
    %c0_6 = arith.constant 0 : index
    %7 = vector.load %arg4[%c0_5, %c0_6] : memref<8x128xf32, #tpu.memory_space<vmem>>, vector<8x128xf32>
    tpu.vector_store %arg4[%c0_5, %c0_6], %6 {strides = array<i32>} : memref<8x128xf32, #tpu.memory_space<vmem>>, vector<8x128xf32>,
    return
  }
  func.func @transform_0(%arg0: i32) -> (i32, i32) {
    %c0_i32 = arith.constant 0 : i32
    %c0_i32_0 = arith.constant 0 : i32
    return %arg0, %c0_i32 : i32, i32
  }
  func.func @transform_1(%arg0: i32) -> (i32, i32) {
    %c0_i32 = arith.constant 0 : i32
    %c0_i32_0 = arith.constant 0 : i32
    %c0_i32_1 = arith.constant 0 : i32
    return %c0_i32, %c0_i32_0 : i32, i32
  }
  func.func @transform_2(%arg0: i32) -> (i32, i32) {
    %c0_i32 = arith.constant 0 : i32
    %c0_i32_0 = arith.constant 0 : i32
    %c0_i32_1 = arith.constant 0 : i32
    return %c0_i32, %c0_i32_0 : i32, i32
  }
  func.func @transform_3(%arg0: i32) -> (i32, i32) {
    %c0_i32 = arith.constant 0 : i32
    %c0_i32_0 = arith.constant 0 : i32
    return %arg0, %c0_i32 : i32, i32
  }
}

</mosaic_0001>

<llo_original>
// kernel: tpu_custom_call.1
$region0: #{tpu_custom_call.1}
  #allocation0 [shape = 'u32[]', space=smem, size = 0x4, offset = 0x4, fixed_abs, tag = 'smem constant byte address 0x4 - core index']
  #allocation1 [shape = 'u32[144,128]{1,0:T(1,128)}', space=vmem, size = 0x12000, scoped, tag = 'internal scratch']
  %s0 = inlined_call_operand.hbm [shape: f32[16,128], index: 0, kind: input, shape index: {}]
  %s1 = inlined_call_operand.hbm [shape: f32[128,128], index: 1, kind: input, shape index: {}]
  %s2 = inlined_call_operand.vmem [shape: f32[1,128], index: 2, kind: input, shape index: {}]
  %s3 = inlined_call_operand.hbm [shape: f32[16,128], index: 3, kind: output, shape index: {}]
  %s4 = sld [smem:[#allocation0]]
  $region53: #{tpu_custom_call.1} parent=0
    _
  %s6 = ssub.s32 1, %s4
  %s7 = scalar_select 0, %s6, %s4
  $region1: #{tpu_custom_call.1} parent=0
    #allocation2 [shape = 'u8[8192]{0}', space=vmem, size = 0x2000, scoped, tag = 'input window, operand 0']
    #allocation3 [shape = 's32[2]{0}', space=sflag, size = 0x8, scoped, tag = 'scoped memory for tpu_custom_call.1']
    #allocation4 [shape = 's32[2]{0}', space=sflag, size = 0x8, scoped, tag = 'scoped memory for tpu_custom_call.1']
    #allocation5 [shape = 'u8[65536]{0}', space=vmem, size = 0x10000, scoped, tag = 'input window, operand 1, single buffered']
    #allocation6 [shape = 's32[1]{0}', space=sflag, size = 0x4, scoped, tag = 'scoped memory for tpu_custom_call.1']
    #allocation7 [shape = 'u8[8192]{0}', space=vmem, size = 0x2000, scoped, tag = 'output window, operand 0']
    %8 = vsyncpa [#allocation3], 0
    %s9 = scalar_lea.sflag [#allocation3], 1
    %10 = vsyncpa %s9, 0
    %11 = vsyncpa [#allocation6], 0
    %12 = vsyncpa [#allocation4], 0
    %s13 = scalar_lea.sflag [#allocation4], 1
    %14 = vsyncpa %s13, 0
    loop: start=0, step=1, limit=4
    $region2: #{tpu_custom_call.1} parent=1 // loop_pre_header
      _
    $region3: #{tpu_custom_call.1} parent=1 // loop_header
      %s16 = sphi 0, %s20
      %p17 = scmp.ge.s32.totalorder %s16, 4
      %s26 = sphi 0, %s28
      %s29 = sphi 0, %s26
      %s30 = sphi 0, %s29
      %s46 = sphi 0, %s30
      %s50 = sphi 0, %s50
      %s52 = sphi 0, %s50
      %s53 = sphi 0, %s52
      %s67 = sphi 0, %s53
      %s71 = sphi 0, %s71
      %s73 = sphi 0, %s71
      %s74 = sphi 0, %s73
      %s88 = sphi 0, %s74
      %s94 = sphi 0, %s96
      %s97 = sphi 0, %s94
      %s98 = sphi 0, %s97
      %s114 = sphi 0, %s98
    $region4: #{tpu_custom_call.1} parent=1 // loop_header_branch
      %19 = sbr.rel (%p17) target = $region8
    $region5: #{tpu_custom_call.1} parent=1 // loop_body
      %s21 = ssub.s32 %s16, 1
      %s22 = ssub.s32 %s16, 2
      %s23 = sadd.s32 %s16, 1
      %s24 = ssub.s32 %s16, %s23
      %p25 = scmp.eq.s32.totalorder %s24, 0
      %s27 = sadd.s32 %s26, 1
      %s28 = scalar_select %p25, %s26, %s27
      %p31 = pneg %p25
      %p32 = scmp.eq.s32.totalorder %s16, 1
      %p33 = por %p31, %p32
      %p34 = scmp.ne.s32.totalorder %s26, %s29
      %p35 = scmp.eq.s32.totalorder %s16, 0
      %p36 = por %p34, %p35
      %p37 = scmp.ne.s32.totalorder %s26, %s29
      %p38 = scmp.eq.s32.totalorder %s21, 1
      %p39 = por %p37, %p38
      %p40 = scmp.ne.s32.totalorder %s29, %s30
      %p41 = scmp.eq.s32.totalorder %s21, 0
      %p42 = por %p40, %p41
      %p43 = scmp.ne.s32.totalorder %s29, %s30
      %p44 = scmp.eq.s32.totalorder %s22, 1
      %p45 = por %p43, %p44
      %p47 = scmp.ne.s32.totalorder %s30, %s46
      %p48 = scmp.eq.s32.totalorder %s22, 0
      %p49 = por %p47, %p48
      %s51 = sadd.s32 %s50, 1
      %p54 = scmp.eq.s32.totalorder %s16, 1
      %p55 = scmp.ne.s32.totalorder %s50, %s52
      %p56 = scmp.eq.s32.totalorder %s16, 0
      %p57 = por %p55, %p56
      %p58 = scmp.ne.s32.totalorder %s50, %s52
      %p59 = scmp.eq.s32.totalorder %s21, 1
      %p60 = por %p58, %p59
      %p61 = scmp.ne.s32.totalorder %s52, %s53
      %p62 = scmp.eq.s32.totalorder %s21, 0
      %p63 = por %p61, %p62
      %p64 = scmp.ne.s32.totalorder %s52, %s53
      %p65 = scmp.eq.s32.totalorder %s22, 1
      %p66 = por %p64, %p65
      %p68 = scmp.ne.s32.totalorder %s53, %s67
      %p69 = scmp.eq.s32.totalorder %s22, 0
      %p70 = por %p68, %p69
      %s72 = sadd.s32 %s71, 1
      %p75 = scmp.eq.s32.totalorder %s16, 1
      %p76 = scmp.ne.s32.totalorder %s71, %s73
      %p77 = scmp.eq.s32.totalorder %s16, 0
      %p78 = por %p76, %p77
      %p79 = scmp.ne.s32.totalorder %s71, %s73
      %p80 = scmp.eq.s32.totalorder %s21, 1
      %p81 = por %p79, %p80
      %p82 = scmp.ne.s32.totalorder %s73, %s74
      %p83 = scmp.eq.s32.totalorder %s21, 0
      %p84 = por %p82, %p83
      %p85 = scmp.ne.s32.totalorder %s73, %s74
      %p86 = scmp.eq.s32.totalorder %s22, 1
      %p87 = por %p85, %p86
      %p89 = scmp.ne.s32.totalorder %s74, %s88
      %p90 = scmp.eq.s32.totalorder %s22, 0
      %p91 = por %p89, %p90
      %s92 = ssub.s32 %s16, %s23
      %p93 = scmp.eq.s32.totalorder %s92, 0
      %s95 = sadd.s32 %s94, 1
      %s96 = scalar_select %p93, %s94, %s95
      %p99 = pneg %p93
      %p100 = scmp.eq.s32.totalorder %s16, 1
      %p101 = por %p99, %p100
      %p102 = scmp.ne.s32.totalorder %s94, %s97
      %p103 = scmp.eq.s32.totalorder %s16, 0
      %p104 = por %p102, %p103
      %p105 = scmp.ne.s32.totalorder %s94, %s97
      %p106 = scmp.eq.s32.totalorder %s21, 1
      %p107 = por %p105, %p106
      %p108 = scmp.ne.s32.totalorder %s97, %s98
      %p109 = scmp.eq.s32.totalorder %s21, 0
      %p110 = por %p108, %p109
      %p111 = scmp.ne.s32.totalorder %s97, %s98
      %p112 = scmp.eq.s32.totalorder %s22, 1
      %p113 = por %p111, %p112
      %p115 = scmp.ne.s32.totalorder %s98, %s114
      %p116 = scmp.eq.s32.totalorder %s22, 0
      %p117 = por %p115, %p116
      %p118 = scmp.le.s32.totalorder 1, %s16
      %p119 = scmp.lt.s32.totalorder %s16, 3
      %p120 = pnand %p118, %p119
      %p121 = pneg %p120
      // Predicated region
      $region9: #{tpu_custom_call.1} parent=5 // pred_check
        _
      $region10: #{tpu_custom_call.1} parent=5 // pred_check_branch
        %123 = sbr.rel (%p120) target = $region12
      $region11: #{tpu_custom_call.1} parent=5 // pred_region
        %s124 = ssub.s32 %s16, 1
        // Predicated region
        $region13: #{tpu_custom_call.1} parent=11 // pred_check
          %p125 = pneg %p63
        $region14: #{tpu_custom_call.1} parent=11 // pred_check_branch
          %127 = sbr.rel (%p125) target = $region16
        $region15: #{tpu_custom_call.1} parent=11 // pred_region
          %s129 = ssub.s32 2048, 2048
          %130 = vsyncadd [#allocation6], %s129
          %s131 = sshll.u32 [#allocation5], 4
          %s132 = int_to_ptr.vmem [resolvable:$true] %s131
          %137 = dma.hbm_to_vmem [thread:$0]  %s1, 2048, %s132, [#allocation6], 128, 128, 8
        $region16: #{tpu_custom_call.1} parent=11 // pred_fallthru
          _
        // Predicated region
        $region17: #{tpu_custom_call.1} parent=11 // pred_check
          %p138 = pneg %p84
        $region18: #{tpu_custom_call.1} parent=11 // pred_check_branch
          %140 = sbr.rel (%p138) target = $region20
        $region19: #{tpu_custom_call.1} parent=11 // pred_region
          _
        $region20: #{tpu_custom_call.1} parent=11 // pred_fallthru
          _
      $region12: #{tpu_custom_call.1} parent=5 // pred_fallthru
        _
      %p141 = scmp.lt.s32.totalorder %s16, 2
      // Predicated region
      $region21: #{tpu_custom_call.1} parent=5 // pred_check
        %p142 = pneg %p141
      $region22: #{tpu_custom_call.1} parent=5 // pred_check_branch
        %144 = sbr.rel (%p142) target = $region24
      $region23: #{tpu_custom_call.1} parent=5 // pred_region
        // Predicated region
        $region25: #{tpu_custom_call.1} parent=23 // pred_check
          %p145 = pneg %p36
        $region26: #{tpu_custom_call.1} parent=23 // pred_check_branch
          %147 = sbr.rel (%p145) target = $region28
        $region27: #{tpu_custom_call.1} parent=23 // pred_region
          %s148 = sand.u32 %s26, 1
          %s149 = scalar_lea.sflag [#allocation3], %s148
          %s150 = sand.u32 %s26, 1
          %s151 = smul.addr %s150, 8
          %s152 = scalar_lea.vmem [#allocation2], %s151
          %s154 = ssub.s32 128, 128
          %155 = vsyncadd %s149, %s154
          %s156 = smul.addr %s16, 128
          %s157 = scalar_lea.hbm %s0, %s156
          %s159 = sshll.u32 %s152, 4
          %s160 = int_to_ptr.vmem [resolvable:$true] %s159
          %162 = dma.hbm_to_vmem [thread:$0]  %s157, 128, %s160, %s149
        $region28: #{tpu_custom_call.1} parent=23 // pred_fallthru
          _
      $region24: #{tpu_custom_call.1} parent=5 // pred_fallthru
        _
      %p163 = scmp.le.s32.totalorder 1, %s16
      %p164 = scmp.lt.s32.totalorder %s16, 3
      %p165 = pnand %p163, %p164
      %p166 = pneg %p165
      // Predicated region
      $region29: #{tpu_custom_call.1} parent=5 // pred_check
        _
      $region30: #{tpu_custom_call.1} parent=5 // pred_check_branch
        %168 = sbr.rel (%p165) target = $region32
      $region31: #{tpu_custom_call.1} parent=5 // pred_region
        %s169 = ssub.s32 %s16, 1
        %s170 = sand.u32 %s29, 1
        %s171 = scalar_lea.sflag [#allocation3], %s170
        %s172 = sand.u32 %s29, 1
        %s173 = smul.addr %s172, 8
        %s174 = scalar_lea.vmem [#allocation2], %s173
        // Predicated region
        $region33: #{tpu_custom_call.1} parent=31 // pred_check
          %p175 = pneg %p42
        $region34: #{tpu_custom_call.1} parent=31 // pred_check_branch
          %177 = sbr.rel (%p175) target = $region36
        $region35: #{tpu_custom_call.1} parent=31 // pred_region
          %178 = dma.done %s171, 128
        $region36: #{tpu_custom_call.1} parent=31 // pred_fallthru
          _
        // Predicated region
        $region37: #{tpu_custom_call.1} parent=31 // pred_check
          %p179 = pneg %p63
        $region38: #{tpu_custom_call.1} parent=31 // pred_check_branch
          %181 = sbr.rel (%p179) target = $region40
        $region39: #{tpu_custom_call.1} parent=31 // pred_region
          %182 = dma.done [#allocation6], 2048
        $region40: #{tpu_custom_call.1} parent=31 // pred_fallthru
          _
        %s183 = sand.u32 %s29, 1
        %s184 = scalar_lea.sflag [#allocation3], %s183
        %s185 = sand.u32 %s29, 1
        %s186 = smul.addr %s185, 8
        %s187 = scalar_lea.vmem [#allocation2], %s186
        %p188 = pneg %p42
        %p189 = pneg %p39
        %p190 = pneg %p63
        %p191 = pneg %p60
        %p192 = pneg %p84
        %p193 = pneg %p81
        %p194 = pneg %p110
        %p195 = pneg %p107
        %s196 = sand.u32 %s97, 1
        %s197 = scalar_lea.sflag [#allocation4], %s196
        %s198 = sand.u32 %s97, 1
        %s199 = smul.addr %s198, 8
        %s200 = scalar_lea.vmem [#allocation7], %s199
        %v201 = vld [vmem:[%s174] sm:$0xff]
        %v202 = vld [vmem:[#allocation5] sm:$0xff]
        %v203 = vld [vmem:[#allocation5 + $0x8] sm:$0xff]
        %v204 = vld [vmem:[#allocation5 + $0x10] sm:$0xff]
        %v205 = vld [vmem:[#allocation5 + $0x18] sm:$0xff]
        %v206 = vld [vmem:[#allocation5 + $0x20] sm:$0xff]
        %v207 = vld [vmem:[#allocation5 + $0x28] sm:$0xff]
        %v208 = vld [vmem:[#allocation5 + $0x30] sm:$0xff]
        %v209 = vld [vmem:[#allocation5 + $0x38] sm:$0xff]
        %v210 = vld [vmem:[#allocation5 + $0x40] sm:$0xff]
        %v211 = vld [vmem:[#allocation5 + $0x48] sm:$0xff]
        %v212 = vld [vmem:[#allocation5 + $0x50] sm:$0xff]
        %v213 = vld [vmem:[#allocation5 + $0x58] sm:$0xff]
        %v214 = vld [vmem:[#allocation5 + $0x60] sm:$0xff]
        %v215 = vld [vmem:[#allocation5 + $0x68] sm:$0xff]
        %v216 = vld [vmem:[#allocation5 + $0x70] sm:$0xff]
        %v217 = vld [vmem:[#allocation5 + $0x78] sm:$0xff]
        %v218 = vld [vmem:[%s2] sm:$0x1]
        %v220 = vlaneseq
        %v221 = vshrl.u32 %v220, 7
        %v222 = vsub.s32 0, %v221
        %v223 = vrot.slane %v218, %v222
        %225 = vmatprep.subr.mxu0 0.0
        %226 = vmatpush1.msra.mxu0 %v202
        %227 = vmatprep.subr.mxu0 0.0
        %228 = vmatpush1.msra.mxu0 %v203
        %229 = vmatprep.subr.mxu0 0.0
        %230 = vmatpush1.msra.mxu0 %v204
        %231 = vmatprep.subr.mxu0 0.0
        %232 = vmatpush1.msra.mxu0 %v205
        %233 = vmatprep.subr.mxu0 0.0
        %234 = vmatpush1.msra.mxu0 %v206
        %235 = vmatprep.subr.mxu0 0.0
        %236 = vmatpush1.msra.mxu0 %v207
        %237 = vmatprep.subr.mxu0 0.0
        %238 = vmatpush1.msra.mxu0 %v208
        %239 = vmatprep.subr.mxu0 0.0
        %240 = vmatpush1.msra.mxu0 %v209
        %241 = vmatprep.subr.mxu0 0.0
        %242 = vmatpush1.msra.mxu0 %v210
        %243 = vmatprep.subr.mxu0 0.0
        %244 = vmatpush1.msra.mxu0 %v211
        %245 = vmatprep.subr.mxu0 0.0
        %246 = vmatpush1.msra.mxu0 %v212
        %247 = vmatprep.subr.mxu0 0.0
        %248 = vmatpush1.msra.mxu0 %v213
        %249 = vmatprep.subr.mxu0 0.0
        %250 = vmatpush1.msra.mxu0 %v214
        %251 = vmatprep.subr.mxu0 0.0
        %252 = vmatpush1.msra.mxu0 %v215
        %253 = vmatprep.subr.mxu0 0.0
        %254 = vmatpush1.msra.mxu0 %v216
        %255 = vmatprep.subr.mxu0 0.0
        %256 = vmatpush1.msra.mxu0 %v217
        %257 = vmatprep.subr.mxu0 0.0
        %258 = vmatpush1.msra.mxu0 0.0
        %259 = vmatprep.subr.mxu0 0.0
        %260 = vmatpush1.msra.mxu0 0.0
        %261 = vmatprep.subr.mxu0 0.0
        %262 = vmatpush1.msra.mxu0 0.0
        %263 = vmatprep.subr.mxu0 0.0
        %264 = vmatpush1.msra.mxu0 0.0
        %265 = vmatprep.subr.mxu0 0.0
        %266 = vmatpush1.msra.mxu0 0.0
        %267 = vmatprep.subr.mxu0 0.0
        %268 = vmatpush1.msra.mxu0 0.0
        %269 = vmatprep.subr.mxu0 0.0
        %270 = vmatpush1.msra.mxu0 0.0
        %271 = vmatprep.subr.mxu0 0.0
        %272 = vmatpush1.msra.mxu0 0.0
        %273 = vmatprep.subr.mxu0 0.0
        %274 = vmatpush1.msra.mxu0 0.0
        %275 = vmatprep.subr.mxu0 0.0
        %276 = vmatpush1.msra.mxu0 0.0
        %277 = vmatprep.subr.mxu0 0.0
        %278 = vmatpush1.msra.mxu0 0.0
        %279 = vmatprep.subr.mxu0 0.0
        %280 = vmatpush1.msra.mxu0 0.0
        %281 = vmatprep.subr.mxu0 0.0
        %282 = vmatpush1.msra.mxu0 0.0
        %283 = vmatprep.subr.mxu0 0.0
        %284 = vmatpush1.msra.mxu0 0.0
        %285 = vmatprep.subr.mxu0 0.0
        %286 = vmatpush1.msra.mxu0 0.0
        %287 = vmatprep.subr.mxu0 0.0
        %288 = vmatpush1.msra.mxu0 0.0
        %289 = vmatprep.mubr.f32.mxu0 0.0
        %290 = vmatmul.mubr.f32.gmra.mrb[0].mxu0 %v201
        %v291 = vpop.f32.mrb[0].mxu0
        %v292 = vadd.f32 %v223, %v291
        %v293 = vpop.f32.mrb[0].mxu0
        %294 = vdwg.mxu0
        %v295 = vadd.f32 %v292, %v201
        %296 = vst [vmem:[%s200] sm:$0xff] %v295
        %s297 = sand.u32 %s97, 1
        %s298 = scalar_lea.sflag [#allocation4], %s297
        %s299 = sand.u32 %s97, 1
        %s300 = smul.addr %s299, 8
        %s301 = scalar_lea.vmem [#allocation7], %s300
        // Predicated region
        $region41: #{tpu_custom_call.1} parent=31 // pred_check
          %p302 = pneg %p107
        $region42: #{tpu_custom_call.1} parent=31 // pred_check_branch
          %304 = sbr.rel (%p302) target = $region44
        $region43: #{tpu_custom_call.1} parent=31 // pred_region
          %s306 = ssub.s32 128, 128
          %307 = vsyncadd %s298, %s306
          %s308 = smul.addr %s21, 128
          %s309 = scalar_lea.hbm %s3, %s308
          %s311 = sshll.u32 %s301, 4
          %s312 = int_to_ptr.vmem [resolvable:$true] %s311
          %314 = dma.vmem_to_hbm [thread:$0]  %s312, 128, %s309, %s298
        $region44: #{tpu_custom_call.1} parent=31 // pred_fallthru
          _
      $region32: #{tpu_custom_call.1} parent=5 // pred_fallthru
        _
      %p315 = scmp.le.s32.totalorder 2, %s16
      // Predicated region
      $region45: #{tpu_custom_call.1} parent=5 // pred_check
        %p316 = pneg %p315
      $region46: #{tpu_custom_call.1} parent=5 // pred_check_branch
        %318 = sbr.rel (%p316) target = $region48
      $region47: #{tpu_custom_call.1} parent=5 // pred_region
        %s319 = ssub.s32 %s16, 2
        // Predicated region
        $region49: #{tpu_custom_call.1} parent=47 // pred_check
          %p320 = pneg %p113
        $region50: #{tpu_custom_call.1} parent=47 // pred_check_branch
          %322 = sbr.rel (%p320) target = $region52
        $region51: #{tpu_custom_call.1} parent=47 // pred_region
          %s323 = sand.u32 %s98, 1
          %s324 = scalar_lea.sflag [#allocation4], %s323
          %s325 = sand.u32 %s98, 1
          %s326 = smul.addr %s325, 8
          %s327 = scalar_lea.vmem [#allocation7], %s326
          %328 = dma.done %s324, 128
        $region52: #{tpu_custom_call.1} parent=47 // pred_fallthru
          _
      $region48: #{tpu_custom_call.1} parent=5 // pred_fallthru
        _
    $region6: #{tpu_custom_call.1} parent=1 // loop_footer
      %s20 = sadd.s32 1, %s16
    $region7: #{tpu_custom_call.1} parent=1 // loop_footer_branch
      %15 = sbr.rel target = $region3
    $region8: #{tpu_custom_call.1} parent=1 // loop_exit
      _
    %329 = vsyncpa [#allocation3], 1
    %s330 = scalar_lea.sflag [#allocation3], 1
    %331 = vsyncpa %s330, 1
    %332 = vsyncpa [#allocation6], 1
    %333 = vsyncpa [#allocation4], 1
    %s334 = scalar_lea.sflag [#allocation4], 1
    %335 = vsyncpa %s334, 1

</llo_original>
